<compile_context>
chip_gen: v6e
topology: v6e:2x2x1
jax: 0.10.0
libtpu: 0.0.40
codegen_flags: <defaults>
</compile_context>

<pallas_src>
import jax
import jax.numpy as jnp
from jax import lax
from jax.experimental import pallas as pl
from jax.experimental.pallas import tpu as pltpu


_VMEM_LIMIT_BYTES = 48 * 1024 * 1024


def _default_vmem_budget():
    """Per-step working-set target, derived from physical VMEM."""
    cap = 128 * 1024 * 1024
    try:
        cap = int(getattr(pltpu.get_tpu_info(), "vmem_capacity_bytes", cap))
    except Exception:
        pass
    # ~1/3 of physical VMEM (v5e/v6e 128 MiB -> ~36 MiB, v7x 64 MiB -> ~21 MiB),
    # leaving headroom under the 48 MiB scoped limit for compiler temps.
    return max(8 * 1024 * 1024, min(cap // 3, 36 * 1024 * 1024))


def _pick_tile_rows(N, H2, W2, Cin, Cout, pad_lanes, budget_bytes):
    """Pick the output-row tile TH.

    Tiled (halo) path requires: H2 % TH == 0, TH % 8 == 0, (TH*W2) % 128 == 0.
    Falls back to a single whole-image tile when no aligned divisor exists
    (e.g. the tiny self-test shapes)."""
    def need(th):
        m = th * W2
        return (2 * Cin * m * 2                          # main input block (bf16, x2 buffers)
                + 2 * Cin * 8 * W2 * 2                   # halo block (bf16, x2 buffers)
                + 2 * Cout * m * 2                       # output block (bf16, x2 buffers)
                + Cin * (m + 2 * W2 + 2 * pad_lanes) * 2  # window scratch (bf16)
                + 9 * Cin * m * 2                        # im2col scratch (bf16)
                + 3 * Cout * m * 4)                      # f32 matmul acc + epilogue temps

    cands = [th for th in range(8, H2 + 1, 8)
             if H2 % th == 0 and (th * W2) % 128 == 0]
    if N == 1:
        # v7x megacore: keep at least 2 row tiles so both cores get work.
        multi = [th for th in cands if H2 // th >= 2]
        if multi:
            cands = multi
    fit = [th for th in cands if need(th) <= budget_bytes]
    if fit:
        return max(fit)
    if cands:
        return min(cands)   # smallest aligned tile; may exceed the soft budget
    return H2               # single whole-(small)-image tile


def _make_kernel(Cin, Cout, TH, W2, PAD, use_halo):
    M = TH * W2            # flattened spatial size of one output row tile
    WIN = M + 2 * W2       # flat window length: TH + 2 padded rows of width W2

    def kernel(*refs):
        if use_halo:
            xm_ref, xh_ref, w_ref, shift_ref, mask_ref, o_ref, wf_ref, col_ref = refs
        else:
            xm_ref, w_ref, shift_ref, mask_ref, o_ref, wf_ref, col_ref = refs

        # Zero the slack around the window so the +-1-shifted taps never read
        # uninitialized VMEM (those positions are masked, but NaN * 0 != 0).
        zeros_pad = jnp.zeros((Cin, PAD), dtype=wf_ref.dtype)
        wf_ref[:, 0:PAD] = zeros_pad
        wf_ref[:, PAD + WIN:PAD + WIN + PAD] = zeros_pad

        # Assemble the flat channel-major window (rows [t*TH, t*TH + TH + 2) of
        # the row-padded input).  All copies are full-lane-width bf16 stores.
        if use_halo:
            wf_ref[:, PAD:PAD + M] = xm_ref[0]
            wf_ref[:, PAD + M:PAD + M + W2] = xh_ref[0, :, 0, :]
            wf_ref[:, PAD + M + W2:PAD + WIN] = xh_ref[0, :, 1, :]
        else:
            # Single-tile case: the main block already holds all TH+2 padded rows.
            wf_ref[:, PAD:PAD + WIN] = xm_ref[0]

        # im2col (channel-major):
        #   col[(3*kh + kw)*Cin + ci, r*W2 + j] = window[ci, r + kh, j + kw - 1]
        # with zeros where the column j + kw - 1 falls outside [0, W2).  Each of
        # the 9 tap stores is a full (Cin, M) lane-dense bf16 slab.
        maskL = mask_ref[0:1, :]   # zero where j == 0       (kw = 0 tap)
        maskR = mask_ref[1:2, :]   # zero where j == W2 - 1  (kw = 2 tap)
        for kh in range(3):
            b0 = PAD + kh * W2
            col_ref[(3 * kh + 0) * Cin:(3 * kh + 1) * Cin, :] = \
                wf_ref[:, b0 - 1:b0 - 1 + M] * maskL
            col_ref[(3 * kh + 1) * Cin:(3 * kh + 2) * Cin, :] = \
                wf_ref[:, b0:b0 + M]
            col_ref[(3 * kh + 2) * Cin:(3 * kh + 3) * Cin, :] = \
                wf_ref[:, b0 + 1:b0 + 1 + M] * maskR

        # One fused bf16 x bf16 -> f32 MXU matmul (K = 9*Cin, BN scale folded).
        acc = jnp.dot(w_ref[...], col_ref[...],
                      preferred_element_type=jnp.float32)        # (Cout, M)

        # Epilogue: fused BN shift + SiLU, kept in f32 (v5e has no bf16 VPU/EUP),
        # then a single lane-dense bf16 store in channel-major (NCHW) layout.
        y = acc + shift_ref[...]
        y = y * jax.nn.sigmoid(y)
        o_ref[0] = y.astype(o_ref.dtype)

    return kernel


def focus_forward(x_nchw, w_khkwio, gamma, beta, running_mean, running_var,
                  eps=1e-5, out_dtype=jnp.bfloat16, vmem_budget_bytes=None):
    """Focus forward pass (matches the PyTorch module; NCHW in / NCHW out).

    Note: inputs/weights are cast to bf16 and the output is emitted in bf16
    (intentional precision trade-off vs. the f32 PyTorch module; pass
    out_dtype=jnp.float32 for an f32 output)."""
    N, C1, H, W = x_nchw.shape
    assert H % 2 == 0 and W % 2 == 0, (H, W)
    Cin = 4 * C1
    KH, KW, wCin, Cout = w_khkwio.shape
    assert (KH, KW, wCin) == (3, 3, Cin), w_khkwio.shape
    H2, W2 = H // 2, W // 2
    Hp = H2 + 2

    # --- wrapper glue (stays channel-major; fuses into ~1 pass in XLA) ---
    x_bf = x_nchw.astype(jnp.bfloat16)
    sd = jnp.concatenate([x_bf[..., 0::2, 0::2], x_bf[..., 1::2, 0::2],
                          x_bf[..., 0::2, 1::2], x_bf[..., 1::2, 1::2]],
                         axis=1)                                  # (N, Cin, H2, W2)
    xp = jnp.pad(sd, ((0, 0), (0, 0), (1, 1), (0, 0)))            # rows only; cols via masks
    xp_flat = xp.reshape(N, Cin, Hp * W2)                         # bitcast view

    # Fold BN scale into the conv weights; only the shift stays in the epilogue.
    inv = gamma / jnp.sqrt(running_var + eps)                     # (Cout,)
    w_t = jnp.transpose((w_khkwio * inv[None, None, None, :])
                        .reshape(9 * Cin, Cout)).astype(jnp.bfloat16)   # (Cout, 9*Cin)
    shift = (beta - running_mean * inv).reshape(Cout, 1).astype(jnp.float32)

    PAD = 128
    if vmem_budget_bytes is None:
        vmem_budget_bytes = _default_vmem_budget()
    TH = _pick_tile_rows(N, H2, W2, Cin, Cout, PAD, vmem_budget_bytes)
    n_tiles = H2 // TH
    use_halo = n_tiles > 1
    M = TH * W2

    # Horizontal-pad masks for the shifted taps (0/1, bf16).
    jidx = jnp.arange(M, dtype=jnp.int32) % W2
    masks = jnp.stack([(jidx != 0), (jidx != W2 - 1)]).astype(jnp.bfloat16)  # (2, M)

    kernel = _make_kernel(Cin, Cout, TH, W2, PAD, use_halo)

    if use_halo:
        in_specs = [
            # TH main rows (flattened, lane-dense) for this output row tile.
            pl.BlockSpec((1, Cin, M), lambda n, t: (n, 0, t)),
            # 8-row block just below the tile (only its first 2 rows are used;
            # the last tile's block is a legal partial block thanks to the
            # bottom zero-pad row).
            pl.BlockSpec((1, Cin, 8, W2), lambda n, t: (n, 0, (t + 1) * (TH // 8), 0)),
        ]
        inputs = (xp_flat, xp)
    else:
        # Whole (small) padded image in one block; no halo needed.
        in_specs = [pl.BlockSpec((1, Cin, Hp * W2), lambda n, t: (n, 0, 0))]
        inputs = (xp_flat,)
    in_specs += [
        pl.BlockSpec((Cout, 9 * Cin), lambda n, t: (0, 0)),   # weights (resident)
        pl.BlockSpec((Cout, 1), lambda n, t: (0, 0)),         # BN shift
        pl.BlockSpec((2, M), lambda n, t: (0, 0)),            # horizontal-pad masks
    ]
    inputs = inputs + (w_t, shift, masks)

    out_flat = pl.pallas_call(
        kernel,
        out_shape=jax.ShapeDtypeStruct((N, Cout, H2 * W2), out_dtype),
        grid_spec=pltpu.PrefetchScalarGridSpec(
            num_scalar_prefetch=0,
            grid=(N, n_tiles),
            in_specs=in_specs,
            out_specs=pl.BlockSpec((1, Cout, M), lambda n, t: (n, 0, t)),
            scratch_shapes=[
                pltpu.VMEM((Cin, 2 * PAD + (TH + 2) * W2), jnp.bfloat16),  # window
                pltpu.VMEM((9 * Cin, M), jnp.bfloat16),                    # im2col
            ],
        ),
        compiler_params=pltpu.CompilerParams(
            dimension_semantics=("parallel", "parallel"),
            vmem_limit_bytes=_VMEM_LIMIT_BYTES,
        ),
    )(*inputs)

    # Free reshape: the kernel already emitted channel-major (NCHW) data.
    return out_flat.reshape(N, Cout, H2, W2)


def focus_reference(x_nchw, w_khkwio, gamma, beta, running_mean, running_var,
                    eps=1e-5, quantize_like_kernel=False):
    """Pure-JAX reference mirroring the PyTorch module (NCHW).

    With quantize_like_kernel=True the inputs/weights are rounded to bf16
    exactly as the Pallas path does (isolates kernel logic from quantization)."""
    a = x_nchw[..., 0::2, 0::2]
    b = x_nchw[..., 1::2, 0::2]
    c = x_nchw[..., 0::2, 1::2]
    d = x_nchw[..., 1::2, 1::2]
    sd = jnp.concatenate([a, b, c, d], axis=1)
    inv = gamma / jnp.sqrt(running_var + eps)
    shift = beta - running_mean * inv
    w_eff = w_khkwio * inv[None, None, None, :]
    if quantize_like_kernel:
        sd = sd.astype(jnp.bfloat16).astype(jnp.float32)
        w_eff = w_eff.astype(jnp.bfloat16).astype(jnp.float32)
    w_oihw = jnp.transpose(w_eff, (3, 2, 0, 1))
    y = lax.conv_general_dilated(
        sd, w_oihw, window_strides=(1, 1), padding=((1, 1), (1, 1)),
        dimension_numbers=("NCHW", "OIHW", "NCHW"),
        precision=lax.Precision.HIGHEST)
    y = y + shift.reshape(1, -1, 1, 1)
    return y * jax.nn.sigmoid(y)


if __name__ == "__main__":
    key = jax.random.PRNGKey(0)
    k_x, k_w, k_g, k_b, k_m, k_v = jax.random.split(key, 6)

    # Small shapes: Focus(c1=4, c2=32, k=3, s=1, p=1)
    N, C1, H, W = 2, 4, 16, 16
    C2 = 32
    Cin = 4 * C1

    x = jax.random.normal(k_x, (N, C1, H, W), dtype=jnp.float32)
    w = jax.random.normal(k_w, (3, 3, Cin, C2), dtype=jnp.float32) * 0.1
    gamma = 1.0 + 0.1 * jax.random.normal(k_g, (C2,), dtype=jnp.float32)
    beta = 0.1 * jax.random.normal(k_b, (C2,), dtype=jnp.float32)
    running_mean = 0.1 * jax.random.normal(k_m, (C2,), dtype=jnp.float32)
    running_var = jnp.abs(1.0 + 0.1 * jax.random.normal(k_v, (C2,), dtype=jnp.float32))

    out = jax.jit(focus_forward)(x, w, gamma, beta, running_mean, running_var)
    out = jax.block_until_ready(out)
    assert out.shape == (N, C2, H // 2, W // 2), out.shape
    out_f32 = out.astype(jnp.float32)

    # Tight check: reference with the same bf16 rounding of inputs/weights
    # (remaining differences: f32 accumulation order + bf16 output rounding).
    ref_q = focus_reference(x, w, gamma, beta, running_mean, running_var,
                            quantize_like_kernel=True)
    err_q = float(jnp.max(jnp.abs(out_f32 - ref_q)))
    assert err_q < 3e-2, err_q

    # Loose sanity check against the exact f32 module semantics.
    ref = focus_reference(x, w, gamma, beta, running_mean, running_var)
    err = float(jnp.max(jnp.abs(out_f32 - ref)))
    assert err < 1e-1, err

    print("KERNEL_OK")
</pallas_src>

<mosaic_0001>
module attributes {stable_mosaic.version = 11 : i64} {
  func.func @kernel(%arg0: i32, %arg1: i32, %arg2: memref<1x16x80xbf16, #tpu.memory_space<vmem>>, %arg3: memref<32x144xbf16, #tpu.memory_space<vmem>>, %arg4: memref<32x1xf32, #tpu.memory_space<vmem>>, %arg5: memref<2x64xbf16, #tpu.memory_space<vmem>>, %arg6: memref<1x32x64xbf16, #tpu.memory_space<vmem>>, %arg7: memref<16x336xbf16, #tpu.memory_space<vmem>>, %arg8: memref<144x64xbf16, #tpu.memory_space<vmem>>) attributes {dimension_semantics = [#tpu.dimension_semantics<parallel>, #tpu.dimension_semantics<parallel>], iteration_bounds = array<i64: 2, 1>, scalar_prefetch = 0 : i64, scratch_operands = 2 : i64, tpu.core_type = #tpu.core_type<tc>, window_params = [{transform_indices = @transform_0, window_bounds = array<i64: 1, 16, 80>}, {pipeline_mode = #tpu.pipeline_mode<synchronous>, transform_indices = @transform_1, window_bounds = array<i64: 32, 144>}, {pipeline_mode = #tpu.pipeline_mode<synchronous>, transform_indices = @transform_2, window_bounds = array<i64: 32, 1>}, {pipeline_mode = #tpu.pipeline_mode<synchronous>, transform_indices = @transform_3, window_bounds = array<i64: 2, 64>}, {transform_indices = @transform_4, window_bounds = array<i64: 1, 32, 64>}]} {
    %cst = arith.constant 0.000000e+00 : bf16
    %0 = vector.broadcast %cst : bf16 to vector<16x128xbf16>
    %c0 = arith.constant 0 : index
    %c0_0 = arith.constant 0 : index
    %1 = vector.load %arg7[%c0, %c0_0] : memref<16x336xbf16, #tpu.memory_space<vmem>>, vector<16x128xbf16>
    tpu.vector_store %arg7[%c0, %c0_0], %0 {strides = array<i32>} : memref<16x336xbf16, #tpu.memory_space<vmem>>, vector<16x128xbf16>,
    %c0_1 = arith.constant 0 : index
    %c208 = arith.constant 208 : index
    %2 = vector.load %arg7[%c0_1, %c208] : memref<16x336xbf16, #tpu.memory_space<vmem>>, vector<16x128xbf16>
    tpu.vector_store %arg7[%c0_1, %c208], %0 {strides = array<i32>} : memref<16x336xbf16, #tpu.memory_space<vmem>>, vector<16x128xbf16>,
    %c0_2 = arith.constant 0 : index
    %c0_3 = arith.constant 0 : index
    %c0_4 = arith.constant 0 : index
    %3 = vector.load %arg2[%c0_2, %c0_3, %c0_4] : memref<1x16x80xbf16, #tpu.memory_space<vmem>>, vector<1x16x80xbf16>
    %4 = vector.shape_cast %3 : vector<1x16x80xbf16> to vector<16x80xbf16>
    %c0_5 = arith.constant 0 : index
    %c128 = arith.constant 128 : index
    %5 = vector.load %arg7[%c0_5, %c128] : memref<16x336xbf16, #tpu.memory_space<vmem>>, vector<16x80xbf16>
    tpu.vector_store %arg7[%c0_5, %c128], %4 {strides = array<i32>} : memref<16x336xbf16, #tpu.memory_space<vmem>>, vector<16x80xbf16>,
    %c0_6 = arith.constant 0 : index
    %c0_7 = arith.constant 0 : index
    %6 = vector.load %arg5[%c0_6, %c0_7] : memref<2x64xbf16, #tpu.memory_space<vmem>>, vector<1x64xbf16>
    %c1 = arith.constant 1 : index
    %c0_8 = arith.constant 0 : index
    %7 = vector.load %arg5[%c1, %c0_8] : memref<2x64xbf16, #tpu.memory_space<vmem>>, vector<1x64xbf16>
    %c0_9 = arith.constant 0 : index
    %c127 = arith.constant 127 : index
    %8 = vector.load %arg7[%c0_9, %c127] : memref<16x336xbf16, #tpu.memory_space<vmem>>, vector<16x64xbf16>
    %9 = vector.broadcast %6 : vector<1x64xbf16> to vector<16x64xbf16>
    %10 = arith.mulf %8, %9 : vector<16x64xbf16>
    %c0_10 = arith.constant 0 : index
    %c0_11 = arith.constant 0 : index
    %11 = vector.load %arg8[%c0_10, %c0_11] : memref<144x64xbf16, #tpu.memory_space<vmem>>, vector<16x64xbf16>
    tpu.vector_store %arg8[%c0_10, %c0_11], %10 {strides = array<i32>} : memref<144x64xbf16, #tpu.memory_space<vmem>>, vector<16x64xbf16>,
    %c0_12 = arith.constant 0 : index
    %c128_13 = arith.constant 128 : index
    %12 = vector.load %arg7[%c0_12, %c128_13] : memref<16x336xbf16, #tpu.memory_space<vmem>>, vector<16x64xbf16>
    %c16 = arith.constant 16 : index
    %c0_14 = arith.constant 0 : index
    %13 = vector.load %arg8[%c16, %c0_14] : memref<144x64xbf16, #tpu.memory_space<vmem>>, vector<16x64xbf16>
    tpu.vector_store %arg8[%c16, %c0_14], %12 {strides = array<i32>} : memref<144x64xbf16, #tpu.memory_space<vmem>>, vector<16x64xbf16>,
    %c0_15 = arith.constant 0 : index
    %c129 = arith.constant 129 : index
    %14 = vector.load %arg7[%c0_15, %c129] : memref<16x336xbf16, #tpu.memory_space<vmem>>, vector<16x64xbf16>
    %15 = vector.broadcast %7 : vector<1x64xbf16> to vector<16x64xbf16>
    %16 = arith.mulf %14, %15 : vector<16x64xbf16>
    %c32 = arith.constant 32 : index
    %c0_16 = arith.constant 0 : index
    %17 = vector.load %arg8[%c32, %c0_16] : memref<144x64xbf16, #tpu.memory_space<vmem>>, vector<16x64xbf16>
    tpu.vector_store %arg8[%c32, %c0_16], %16 {strides = array<i32>} : memref<144x64xbf16, #tpu.memory_space<vmem>>, vector<16x64xbf16>,
    %c0_17 = arith.constant 0 : index
    %c135 = arith.constant 135 : index
    %18 = vector.load %arg7[%c0_17, %c135] : memref<16x336xbf16, #tpu.memory_space<vmem>>, vector<16x64xbf16>
    %19 = vector.broadcast %6 : vector<1x64xbf16> to vector<16x64xbf16>
    %20 = arith.mulf %18, %19 : vector<16x64xbf16>
    %c48 = arith.constant 48 : index
    %c0_18 = arith.constant 0 : index
    %21 = vector.load %arg8[%c48, %c0_18] : memref<144x64xbf16, #tpu.memory_space<vmem>>, vector<16x64xbf16>
    tpu.vector_store %arg8[%c48, %c0_18], %20 {strides = array<i32>} : memref<144x64xbf16, #tpu.memory_space<vmem>>, vector<16x64xbf16>,
    %c0_19 = arith.constant 0 : index
    %c136 = arith.constant 136 : index
    %22 = vector.load %arg7[%c0_19, %c136] : memref<16x336xbf16, #tpu.memory_space<vmem>>, vector<16x64xbf16>
    %c64 = arith.constant 64 : index
    %c0_20 = arith.constant 0 : index
    %23 = vector.load %arg8[%c64, %c0_20] : memref<144x64xbf16, #tpu.memory_space<vmem>>, vector<16x64xbf16>
    tpu.vector_store %arg8[%c64, %c0_20], %22 {strides = array<i32>} : memref<144x64xbf16, #tpu.memory_space<vmem>>, vector<16x64xbf16>,
    %c0_21 = arith.constant 0 : index
    %c137 = arith.constant 137 : index
    %24 = vector.load %arg7[%c0_21, %c137] : memref<16x336xbf16, #tpu.memory_space<vmem>>, vector<16x64xbf16>
    %25 = vector.broadcast %7 : vector<1x64xbf16> to vector<16x64xbf16>
    %26 = arith.mulf %24, %25 : vector<16x64xbf16>
    %c80 = arith.constant 80 : index
    %c0_22 = arith.constant 0 : index
    %27 = vector.load %arg8[%c80, %c0_22] : memref<144x64xbf16, #tpu.memory_space<vmem>>, vector<16x64xbf16>
    tpu.vector_store %arg8[%c80, %c0_22], %26 {strides = array<i32>} : memref<144x64xbf16, #tpu.memory_space<vmem>>, vector<16x64xbf16>,
    %c0_23 = arith.constant 0 : index
    %c143 = arith.constant 143 : index
    %28 = vector.load %arg7[%c0_23, %c143] : memref<16x336xbf16, #tpu.memory_space<vmem>>, vector<16x64xbf16>
    %29 = vector.broadcast %6 : vector<1x64xbf16> to vector<16x64xbf16>
    %30 = arith.mulf %28, %29 : vector<16x64xbf16>
    %c96 = arith.constant 96 : index
    %c0_24 = arith.constant 0 : index
    %31 = vector.load %arg8[%c96, %c0_24] : memref<144x64xbf16, #tpu.memory_space<vmem>>, vector<16x64xbf16>
    tpu.vector_store %arg8[%c96, %c0_24], %30 {strides = array<i32>} : memref<144x64xbf16, #tpu.memory_space<vmem>>, vector<16x64xbf16>,
    %c0_25 = arith.constant 0 : index
    %c144 = arith.constant 144 : index
    %32 = vector.load %arg7[%c0_25, %c144] : memref<16x336xbf16, #tpu.memory_space<vmem>>, vector<16x64xbf16>
    %c112 = arith.constant 112 : index
    %c0_26 = arith.constant 0 : index
    %33 = vector.load %arg8[%c112, %c0_26] : memref<144x64xbf16, #tpu.memory_space<vmem>>, vector<16x64xbf16>
    tpu.vector_store %arg8[%c112, %c0_26], %32 {strides = array<i32>} : memref<144x64xbf16, #tpu.memory_space<vmem>>, vector<16x64xbf16>,
    %c0_27 = arith.constant 0 : index
    %c145 = arith.constant 145 : index
    %34 = vector.load %arg7[%c0_27, %c145] : memref<16x336xbf16, #tpu.memory_space<vmem>>, vector<16x64xbf16>
    %35 = vector.broadcast %7 : vector<1x64xbf16> to vector<16x64xbf16>
    %36 = arith.mulf %34, %35 : vector<16x64xbf16>
    %c128_28 = arith.constant 128 : index
    %c0_29 = arith.constant 0 : index
    %37 = vector.load %arg8[%c128_28, %c0_29] : memref<144x64xbf16, #tpu.memory_space<vmem>>, vector<16x64xbf16>
    tpu.vector_store %arg8[%c128_28, %c0_29], %36 {strides = array<i32>} : memref<144x64xbf16, #tpu.memory_space<vmem>>, vector<16x64xbf16>,
    %c0_30 = arith.constant 0 : index
    %c0_31 = arith.constant 0 : index
    %38 = vector.load %arg3[%c0_30, %c0_31] : memref<32x144xbf16, #tpu.memory_space<vmem>>, vector<32x144xbf16>
    %c0_32 = arith.constant 0 : index
    %c0_33 = arith.constant 0 : index
    %39 = vector.load %arg8[%c0_32, %c0_33] : memref<144x64xbf16, #tpu.memory_space<vmem>>, vector<144x64xbf16>
    %cst_34 = arith.constant dense<0.000000e+00> : vector<32x64xf32>
    %40 = tpu.matmul %38, %39, %cst_34 {dimension_numbers = #tpu.dot_dimension_numbers<[1], [0], [0], [1], [0, 0, 1, 1], [], []>} : vector<32x144xbf16>, vector<144x64xbf16>, vector<32x64xf32> -> vector<32x64xf32>
    %c0_35 = arith.constant 0 : index
    %c0_36 = arith.constant 0 : index
    %41 = vector.load %arg4[%c0_35, %c0_36] : memref<32x1xf32, #tpu.memory_space<vmem>>, vector<32x1xf32>
    %42 = vector.broadcast %41 : vector<32x1xf32> to vector<32x64xf32>
    %43 = arith.addf %40, %42 : vector<32x64xf32>
    %44 = arith.negf %43 : vector<32x64xf32>
    %45 = math.exp %44 : vector<32x64xf32>
    %cst_37 = arith.constant 1.000000e+00 : f32
    %46 = vector.broadcast %cst_37 : f32 to vector<32x64xf32>
    %47 = arith.addf %46, %45 : vector<32x64xf32>
    %48 = arith.divf %46, %47 : vector<32x64xf32>
    %49 = arith.mulf %43, %48 : vector<32x64xf32>
    %50 = arith.truncf %49 : vector<32x64xf32> to vector<32x64xbf16>
    %c0_38 = arith.constant 0 : index
    %c0_39 = arith.constant 0 : index
    %c0_40 = arith.constant 0 : index
    %51 = vector.load %arg6[%c0_38, %c0_39, %c0_40] : memref<1x32x64xbf16, #tpu.memory_space<vmem>>, vector<1x32x64xbf16>
    %52 = vector.shape_cast %51 : vector<1x32x64xbf16> to vector<32x64xbf16>
    %53 = vector.shape_cast %50 : vector<32x64xbf16> to vector<1x32x64xbf16>
    tpu.vector_store %arg6[%c0_38, %c0_39, %c0_40], %53 {strides = array<i32>} : memref<1x32x64xbf16, #tpu.memory_space<vmem>>, vector<1x32x64xbf16>,
    return
  }
  func.func @transform_0(%arg0: i32, %arg1: i32) -> (i32, i32, i32) {
    %c0_i32 = arith.constant 0 : i32
    %c0_i32_0 = arith.constant 0 : i32
    %c0_i32_1 = arith.constant 0 : i32
    return %arg0, %c0_i32, %c0_i32_0 : i32, i32, i32
  }
  func.func @transform_1(%arg0: i32, %arg1: i32) -> (i32, i32) {
    %c0_i32 = arith.constant 0 : i32
    %c0_i32_0 = arith.constant 0 : i32
    %c0_i32_1 = arith.constant 0 : i32
    return %c0_i32, %c0_i32_0 : i32, i32
  }
  func.func @transform_2(%arg0: i32, %arg1: i32) -> (i32, i32) {
    %c0_i32 = arith.constant 0 : i32
    %c0_i32_0 = arith.constant 0 : i32
    %c0_i32_1 = arith.constant 0 : i32
    return %c0_i32, %c0_i32_0 : i32, i32
  }
  func.func @transform_3(%arg0: i32, %arg1: i32) -> (i32, i32) {
    %c0_i32 = arith.constant 0 : i32
    %c0_i32_0 = arith.constant 0 : i32
    %c0_i32_1 = arith.constant 0 : i32
    return %c0_i32, %c0_i32_0 : i32, i32
  }
  func.func @transform_4(%arg0: i32, %arg1: i32) -> (i32, i32, i32) {
    %c0_i32 = arith.constant 0 : i32
    %c0_i32_0 = arith.constant 0 : i32
    return %arg0, %c0_i32, %arg1 : i32, i32, i32
  }
}

</mosaic_0001>

<llo_original>
// kernel: focus_forward.1
$region0: #{focus_forward.1}
  #allocation0 [shape = 'u32[]', space=smem, size = 0x4, offset = 0x4, fixed_abs, tag = 'smem constant byte address 0x4 - core index']
  #allocation1 [shape = 'u32[144,128]{1,0:T(1,128)}', space=vmem, size = 0x12000, scoped, tag = 'internal scratch']
  #allocation2 [shape = 'bf16[16,336]{1,0:T(8,128)(2,1)}', space=vmem, size = 0x3000, scoped, tag = 'scratch operand']
  #allocation3 [shape = 'bf16[144,64]{1,0:T(8,128)(2,1)}', space=vmem, size = 0x9000, scoped, tag = 'scratch operand']
  %s0 = inlined_call_operand.vmem [shape: bf16[2,16,80], index: 0, kind: input, shape index: {}]
  %s1 = inlined_call_operand.vmem [shape: bf16[32,144], index: 1, kind: input, shape index: {}]
  %s2 = inlined_call_operand.vmem [shape: f32[32,1], index: 2, kind: input, shape index: {}]
  %s3 = inlined_call_operand.vmem [shape: bf16[2,64], index: 3, kind: input, shape index: {}]
  %s4 = inlined_call_operand.vmem [shape: bf16[2,32,64], index: 4, kind: output, shape index: {}]
  %s5 = sld [smem:[#allocation0]]
  $region49: #{focus_forward.1} parent=0
    _
  %s7 = ssub.s32 1, %s5
  %s8 = scalar_select 0, %s7, %s5
  loop: start=0, step=1, limit=4
  $region2: #{focus_forward.1} parent=0 // loop_pre_header
    _
  $region3: #{focus_forward.1} parent=0 // loop_header
    %s10 = sphi 0, %s14
    %p11 = scmp.ge.s32.totalorder %s10, 4
    %s17 = sphi 0, %s29
    %s18 = sphi 0, %s25
    %s19 = sphi 0, %s17
    %s20 = sphi 0, %s18
    %s21 = sphi 0, %s19
    %s22 = sphi 0, %s20
    %s32 = sphi 0, %s34
    %s35 = sphi 0, %s32
    %s36 = sphi 0, %s35
    %s52 = sphi 0, %s36
    %s56 = sphi 0, %s56
    %s58 = sphi 0, %s56
    %s59 = sphi 0, %s58
    %s73 = sphi 0, %s59
    %s77 = sphi 0, %s77
    %s79 = sphi 0, %s77
    %s80 = sphi 0, %s79
    %s94 = sphi 0, %s80
    %s98 = sphi 0, %s98
    %s100 = sphi 0, %s98
    %s101 = sphi 0, %s100
    %s115 = sphi 0, %s101
    %s123 = sphi 0, %s125
    %s126 = sphi 0, %s123
    %s127 = sphi 0, %s126
    %s143 = sphi 0, %s127
  $region4: #{focus_forward.1} parent=0 // loop_header_branch
    %13 = sbr.rel (%p11) target = $region8
  $region5: #{focus_forward.1} parent=0 // loop_body
    %s15 = ssub.s32 %s10, 1
    %s16 = ssub.s32 %s10, 2
    %s23 = sadd.s32 1, %s18
    %p24 = scmp.ge.s32.totalorder %s23, 1
    %s25 = scalar_select %p24, 0, %s23
    %s26 = sadd.s32 1, %s17
    %s27 = scalar_select %p24, %s26, %s17
    %p28 = scmp.ge.s32.totalorder %s27, 2
    %s29 = scalar_select %p28, 0, %s27
    %s30 = ssub.s32 %s17, %s29
    %p31 = scmp.eq.s32.totalorder %s30, 0
    %s33 = sadd.s32 %s32, 1
    %s34 = scalar_select %p31, %s32, %s33
    %p37 = pneg %p31
    %p38 = scmp.eq.s32.totalorder %s10, 1
    %p39 = por %p37, %p38
    %p40 = scmp.ne.s32.totalorder %s32, %s35
    %p41 = scmp.eq.s32.totalorder %s10, 0
    %p42 = por %p40, %p41
    %p43 = scmp.ne.s32.totalorder %s32, %s35
    %p44 = scmp.eq.s32.totalorder %s15, 1
    %p45 = por %p43, %p44
    %p46 = scmp.ne.s32.totalorder %s35, %s36
    %p47 = scmp.eq.s32.totalorder %s15, 0
    %p48 = por %p46, %p47
    %p49 = scmp.ne.s32.totalorder %s35, %s36
    %p50 = scmp.eq.s32.totalorder %s16, 1
    %p51 = por %p49, %p50
    %p53 = scmp.ne.s32.totalorder %s36, %s52
    %p54 = scmp.eq.s32.totalorder %s16, 0
    %p55 = por %p53, %p54
    %s57 = sadd.s32 %s56, 1
    %p60 = scmp.eq.s32.totalorder %s10, 1
    %p61 = scmp.ne.s32.totalorder %s56, %s58
    %p62 = scmp.eq.s32.totalorder %s10, 0
    %p63 = por %p61, %p62
    %p64 = scmp.ne.s32.totalorder %s56, %s58
    %p65 = scmp.eq.s32.totalorder %s15, 1
    %p66 = por %p64, %p65
    %p67 = scmp.ne.s32.totalorder %s58, %s59
    %p68 = scmp.eq.s32.totalorder %s15, 0
    %p69 = por %p67, %p68
    %p70 = scmp.ne.s32.totalorder %s58, %s59
    %p71 = scmp.eq.s32.totalorder %s16, 1
    %p72 = por %p70, %p71
    %p74 = scmp.ne.s32.totalorder %s59, %s73
    %p75 = scmp.eq.s32.totalorder %s16, 0
    %p76 = por %p74, %p75
    %s78 = sadd.s32 %s77, 1
    %p81 = scmp.eq.s32.totalorder %s10, 1
    %p82 = scmp.ne.s32.totalorder %s77, %s79
    %p83 = scmp.eq.s32.totalorder %s10, 0
    %p84 = por %p82, %p83
    %p85 = scmp.ne.s32.totalorder %s77, %s79
    %p86 = scmp.eq.s32.totalorder %s15, 1
    %p87 = por %p85, %p86
    %p88 = scmp.ne.s32.totalorder %s79, %s80
    %p89 = scmp.eq.s32.totalorder %s15, 0
    %p90 = por %p88, %p89
    %p91 = scmp.ne.s32.totalorder %s79, %s80
    %p92 = scmp.eq.s32.totalorder %s16, 1
    %p93 = por %p91, %p92
    %p95 = scmp.ne.s32.totalorder %s80, %s94
    %p96 = scmp.eq.s32.totalorder %s16, 0
    %p97 = por %p95, %p96
    %s99 = sadd.s32 %s98, 1
    %p102 = scmp.eq.s32.totalorder %s10, 1
    %p103 = scmp.ne.s32.totalorder %s98, %s100
    %p104 = scmp.eq.s32.totalorder %s10, 0
    %p105 = por %p103, %p104
    %p106 = scmp.ne.s32.totalorder %s98, %s100
    %p107 = scmp.eq.s32.totalorder %s15, 1
    %p108 = por %p106, %p107
    %p109 = scmp.ne.s32.totalorder %s100, %s101
    %p110 = scmp.eq.s32.totalorder %s15, 0
    %p111 = por %p109, %p110
    %p112 = scmp.ne.s32.totalorder %s100, %s101
    %p113 = scmp.eq.s32.totalorder %s16, 1
    %p114 = por %p112, %p113
    %p116 = scmp.ne.s32.totalorder %s101, %s115
    %p117 = scmp.eq.s32.totalorder %s16, 0
    %p118 = por %p116, %p117
    %s119 = ssub.s32 %s17, %s29
    %s120 = ssub.s32 %s18, %s25
    %s121 = sor.u32 %s119, %s120
    %p122 = scmp.eq.s32.totalorder %s121, 0
    %s124 = sadd.s32 %s123, 1
    %s125 = scalar_select %p122, %s123, %s124
    %p128 = pneg %p122
    %p129 = scmp.eq.s32.totalorder %s10, 1
    %p130 = por %p128, %p129
    %p131 = scmp.ne.s32.totalorder %s123, %s126
    %p132 = scmp.eq.s32.totalorder %s10, 0
    %p133 = por %p131, %p132
    %p134 = scmp.ne.s32.totalorder %s123, %s126
    %p135 = scmp.eq.s32.totalorder %s15, 1
    %p136 = por %p134, %p135
    %p137 = scmp.ne.s32.totalorder %s126, %s127
    %p138 = scmp.eq.s32.totalorder %s15, 0
    %p139 = por %p137, %p138
    %p140 = scmp.ne.s32.totalorder %s126, %s127
    %p141 = scmp.eq.s32.totalorder %s16, 1
    %p142 = por %p140, %p141
    %p144 = scmp.ne.s32.totalorder %s127, %s143
    %p145 = scmp.eq.s32.totalorder %s16, 0
    %p146 = por %p144, %p145
    %p147 = scmp.le.s32.totalorder 1, %s10
    %p148 = scmp.lt.s32.totalorder %s10, 3
    %p149 = pnand %p147, %p148
    %p150 = pneg %p149
    // Predicated region
    $region9: #{focus_forward.1} parent=5 // pred_check
      _
    $region10: #{focus_forward.1} parent=5 // pred_check_branch
      %152 = sbr.rel (%p149) target = $region12
    $region11: #{focus_forward.1} parent=5 // pred_region
      %s153 = ssub.s32 %s10, 1
      // Predicated region
      $region13: #{focus_forward.1} parent=11 // pred_check
        %p154 = pneg %p69
      $region14: #{focus_forward.1} parent=11 // pred_check_branch
        %156 = sbr.rel (%p154) target = $region16
      $region15: #{focus_forward.1} parent=11 // pred_region
        _
      $region16: #{focus_forward.1} parent=11 // pred_fallthru
        _
      // Predicated region
      $region17: #{focus_forward.1} parent=11 // pred_check
        %p157 = pneg %p90
      $region18: #{focus_forward.1} parent=11 // pred_check_branch
        %159 = sbr.rel (%p157) target = $region20
      $region19: #{focus_forward.1} parent=11 // pred_region
        _
      $region20: #{focus_forward.1} parent=11 // pred_fallthru
        _
      // Predicated region
      $region21: #{focus_forward.1} parent=11 // pred_check
        %p160 = pneg %p111
      $region22: #{focus_forward.1} parent=11 // pred_check_branch
        %162 = sbr.rel (%p160) target = $region24
      $region23: #{focus_forward.1} parent=11 // pred_region
        _
      $region24: #{focus_forward.1} parent=11 // pred_fallthru
        _
    $region12: #{focus_forward.1} parent=5 // pred_fallthru
      _
    %p163 = scmp.lt.s32.totalorder %s10, 2
    // Predicated region
    $region25: #{focus_forward.1} parent=5 // pred_check
      %p164 = pneg %p163
    $region26: #{focus_forward.1} parent=5 // pred_check_branch
      %166 = sbr.rel (%p164) target = $region28
    $region27: #{focus_forward.1} parent=5 // pred_region
      // Predicated region
      $region29: #{focus_forward.1} parent=27 // pred_check
        %p167 = pneg %p42
      $region30: #{focus_forward.1} parent=27 // pred_check_branch
        %169 = sbr.rel (%p167) target = $region32
      $region31: #{focus_forward.1} parent=27 // pred_region
        %p170 = scmp.lt.s32.totalorder %s17, 1
        %s171 = scalar_select %p170, %s17, 1
        %s172 = smul.addr %s171, 2
        %s173 = smul.addr %s172, 4
        %s174 = scalar_lea.vmem %s0, %s173
      $region32: #{focus_forward.1} parent=27 // pred_fallthru
        _
    $region28: #{focus_forward.1} parent=5 // pred_fallthru
      _
    %p175 = scmp.le.s32.totalorder 1, %s10
    %p176 = scmp.lt.s32.totalorder %s10, 3
    %p177 = pnand %p175, %p176
    %p178 = pneg %p177
    // Predicated region
    $region33: #{focus_forward.1} parent=5 // pred_check
      _
    $region34: #{focus_forward.1} parent=5 // pred_check_branch
      %180 = sbr.rel (%p177) target = $region36
    $region35: #{focus_forward.1} parent=5 // pred_region
      %s181 = ssub.s32 %s10, 1
      %p182 = scmp.lt.s32.totalorder %s19, 1
      %s183 = scalar_select %p182, %s19, 1
      %s184 = smul.addr %s183, 2
      %s185 = smul.addr %s184, 4
      %s186 = scalar_lea.vmem %s0, %s185
      %p187 = pneg %p48
      %p188 = pneg %p45
      %p189 = pneg %p69
      %p190 = pneg %p66
      %p191 = pneg %p90
      %p192 = pneg %p87
      %p193 = pneg %p111
      %p194 = pneg %p108
      %p195 = pneg %p139
      %p196 = pneg %p136
      %p197 = scmp.lt.s32.totalorder %s19, 1
      %s198 = scalar_select %p197, %s19, 1
      %p199 = scmp.lt.s32.totalorder %s20, 0
      %s200 = scalar_select %p199, %s20, 0
      %s201 = smul.addr %s198, 4
      %s202 = sadd.s32 %s200, %s201
      %s203 = smul.addr %s202, 4
      %s204 = scalar_lea.vmem %s4, %s203
      %p205 = scmp.lt.s32.totalorder %s19, 1
      %s206 = scalar_select %p205, %s19, 1
      %s207 = smul.addr %s206, 2
      %s208 = smul.addr %s207, 4
      %s209 = scalar_lea.vmem %s0, %s208
      %p210 = scmp.lt.s32.totalorder %s19, 1
      %s211 = scalar_select %p210, %s19, 1
      %p212 = scmp.lt.s32.totalorder %s20, 0
      %s213 = scalar_select %p212, %s20, 0
      %s214 = smul.addr %s211, 4
      %s215 = sadd.s32 %s213, %s214
      %s216 = smul.addr %s215, 4
      %s217 = scalar_lea.vmem %s4, %s216
      %219 = vst [vmem:[#allocation2] sm:$0xf] 0
      %220 = vst [vmem:[#allocation2 + $0xc] sm:$0xf] 0
      %vm221 = vcmask 1044096
      %vm222 = vcmask 654340
      %vm223 = vmor %vm222, %vm221
      %224 = vst.msk [vmem:[#allocation2 + $0x4] sm:$0xff] %vm223, 0
      %225 = vst.msk [vmem:[#allocation2 + $0x10] sm:$0xff] %vm223, 0
      %v226 = vld [vmem:[%s209] sm:$0xf]
      %v227 = vld [vmem:[%s209 + $0x4] sm:$0xf]
      %vm228 = vcmask 650240
      %229 = vst.msk [vmem:[#allocation2 + $0x4] sm:$0xf] %vm228, %v226
      %230 = vst.msk [vmem:[#allocation2 + $0x10] sm:$0xf] %vm228, %v227
      %v231 = vld [vmem:[%s3] sm:$0x1]
      %v232 = vld [vmem:[#allocation2] sm:$0xff]
      %v233 = vld [vmem:[#allocation2 + $0xc] sm:$0xff]
      %v235 = vpack.i.b16 %v231, %v231
      %v237 = vlaneseq
      %v238 = vshrl.u32 %v237, 7
      %v239 = vsub.s32 0, %v238
      %v240 = vrot.slane %v235, %v239
      %v242 = vunpack.c.l.b16 %v240
      %v243 = vpack.c.b16 %v242, %v242
      %244 = vrot.lane.b32.xlu0 %v243, 127
      %v245 = vpop.permute.xlu0 %244
      %v246 = vrot.slane %v245, 4
      %vm247 = vcmask 1039360
      %v248 = vsel %vm247, %v246, %v245
      %v250 = vmul.bf16 %v232, %v248
      %v251 = vmul.bf16 %v233, %v248
      %254 = vrot.lane.b32.xlu0 %v250, 1
      %v255 = vpop.permute.xlu0 %254
      %256 = vrot.lane.b32.xlu0 %v251, 1
      %v257 = vpop.permute.xlu0 %256
      %v258 = vrot.slane %v255, 4
      %v259 = vrot.slane %v257, 4
      %vm260 = vcmask 7168
      %v261 = vsel %vm260, %v255, %v258
      %v262 = vsel %vm260, %v257, %v259
      %vm265 = vcmask 519168
      %266 = vst.msk [vmem:[#allocation3] sm:$0xf] %vm265, %v261
      %267 = vst.msk [vmem:[#allocation3 + $0x4] sm:$0xf] %vm265, %v262
      %v268 = vld [vmem:[#allocation2 + $0x4] sm:$0xf]
      %v269 = vld [vmem:[#allocation2 + $0x10] sm:$0xf]
      %270 = vst.msk [vmem:[#allocation3 + $0x8] sm:$0xf] %vm265, %v268
      %271 = vst.msk [vmem:[#allocation3 + $0xc] sm:$0xf] %vm265, %v269
      %v272 = vld [vmem:[#allocation2 + $0x4] sm:$0xf]
      %v273 = vld [vmem:[#allocation2 + $0x10] sm:$0xf]
      %v274 = vshrl.u32 %v231, 16
      %v275 = vpack.i.b16 %v274, %v274
      %v277 = vlaneseq
      %v278 = vshrl.u32 %v277, 7
      %v279 = vsub.s32 0, %v278
      %v280 = vrot.slane %v275, %v279
      %v282 = vunpack.c.l.b16 %v280
      %v283 = vpack.c.b16 %v282, %v282
      %284 = vrot.lane.b32.xlu0 %v283, 1
      %v285 = vpop.permute.xlu0 %284
      %v287 = vmul.bf16 %v272, %v285
      %v288 = vmul.bf16 %v273, %v285
      %291 = vrot.lane.b32.xlu0 %v287, 127
      %v292 = vpop.permute.xlu0 %291
      %293 = vrot.lane.b32.xlu0 %v288, 127
      %v294 = vpop.permute.xlu0 %293
      %297 = vst.msk [vmem:[#allocation3 + $0x10] sm:$0xf] %vm265, %v292
      %298 = vst.msk [vmem:[#allocation3 + $0x14] sm:$0xf] %vm265, %v294
      %v299 = vld [vmem:[#allocation2 + $0x4] sm:$0xf]
      %v300 = vld [vmem:[#allocation2 + $0x10] sm:$0xf]
      %301 = vrot.lane.b32.xlu0 %v243, 7
      %v302 = vpop.permute.xlu0 %301
      %v304 = vmul.bf16 %v299, %v302
      %v305 = vmul.bf16 %v300, %v302
      %308 = vrot.lane.b32.xlu0 %v304, 121
      %v309 = vpop.permute.xlu0 %308
      %310 = vrot.lane.b32.xlu0 %v305, 121
      %v311 = vpop.permute.xlu0 %310
      %314 = vst.msk [vmem:[#allocation3 + $0x18] sm:$0xf] %vm265, %v309
      %315 = vst.msk [vmem:[#allocation3 + $0x1c] sm:$0xf] %vm265, %v311
      %v316 = vld [vmem:[#allocation2 + $0x4] sm:$0xf]
      %v317 = vld [vmem:[#allocation2 + $0x10] sm:$0xf]
      %320 = vrot.lane.b32.xlu0 %v316, 120
      %v321 = vpop.permute.xlu0 %320
      %322 = vrot.lane.b32.xlu0 %v317, 120
      %v323 = vpop.permute.xlu0 %322
      %326 = vst.msk [vmem:[#allocation3 + $0x20] sm:$0xf] %vm265, %v321
      %327 = vst.msk [vmem:[#allocation3 + $0x24] sm:$0xf] %vm265, %v323
      %v328 = vld [vmem:[#allocation2 + $0x4] sm:$0xf]
      %v329 = vld [vmem:[#allocation2 + $0x10] sm:$0xf]
      %330 = vrot.lane.b32.xlu0 %v283, 9
      %v331 = vpop.permute.xlu0 %330
      %v333 = vmul.bf16 %v328, %v331
      %v334 = vmul.bf16 %v329, %v331
      %337 = vrot.lane.b32.xlu0 %v333, 119
      %v338 = vpop.permute.xlu0 %337
      %339 = vrot.lane.b32.xlu0 %v334, 119
      %v340 = vpop.permute.xlu0 %339
      %343 = vst.msk [vmem:[#allocation3 + $0x28] sm:$0xf] %vm265, %v338
      %344 = vst.msk [vmem:[#allocation3 + $0x2c] sm:$0xf] %vm265, %v340
      %v345 = vld [vmem:[#allocation2 + $0x4] sm:$0xf]
      %v346 = vld [vmem:[#allocation2 + $0x10] sm:$0xf]
      %347 = vrot.lane.b32.xlu0 %v243, 15
      %v348 = vpop.permute.xlu0 %347
      %v350 = vmul.bf16 %v345, %v348
      %v351 = vmul.bf16 %v346, %v348
      %354 = vrot.lane.b32.xlu0 %v350, 113
      %v355 = vpop.permute.xlu0 %354
      %356 = vrot.lane.b32.xlu0 %v351, 113
      %v357 = vpop.permute.xlu0 %356
      %360 = vst.msk [vmem:[#allocation3 + $0x30] sm:$0xf] %vm265, %v355
      %361 = vst.msk [vmem:[#allocation3 + $0x34] sm:$0xf] %vm265, %v357
      %v362 = vld [vmem:[#allocation2 + $0x4] sm:$0xf]
      %v363 = vld [vmem:[#allocation2 + $0x10] sm:$0xf]
      %366 = vrot.lane.b32.xlu0 %v362, 112
      %v367 = vpop.permute.xlu0 %366
      %368 = vrot.lane.b32.xlu0 %v363, 112
      %v369 = vpop.permute.xlu0 %368
      %372 = vst.msk [vmem:[#allocation3 + $0x38] sm:$0xf] %vm265, %v367
      %373 = vst.msk [vmem:[#allocation3 + $0x3c] sm:$0xf] %vm265, %v369
      %v374 = vld [vmem:[#allocation2 + $0x4] sm:$0xf]
      %v375 = vld [vmem:[#allocation2 + $0x10] sm:$0xf]
      %376 = vrot.lane.b32.xlu0 %v283, 17
      %v377 = vpop.permute.xlu0 %376
      %v379 = vmul.bf16 %v374, %v377
      %v380 = vmul.bf16 %v375, %v377
      %383 = vrot.lane.b32.xlu0 %v379, 111
      %v384 = vpop.permute.xlu0 %383
      %385 = vrot.lane.b32.xlu0 %v380, 111
      %v386 = vpop.permute.xlu0 %385
      %389 = vst.msk [vmem:[#allocation3 + $0x40] sm:$0xf] %vm265, %v384
      %390 = vst.msk [vmem:[#allocation3 + $0x44] sm:$0xf] %vm265, %v386
      %v391 = vld [vmem:[%s1] sm:$0xff]
      %v392 = vld [vmem:[%s1 + $0x8] sm:$0xff]
      %v393 = vld [vmem:[%s1 + $0x10] sm:$0xff]
      %v394 = vld [vmem:[%s1 + $0x18] sm:$0xff]
      %v395 = vld [vmem:[#allocation3] sm:$0xf]
      %v396 = vld [vmem:[#allocation3 + $0x4] sm:$0xf]
      %v397 = vld [vmem:[#allocation3 + $0x8] sm:$0xf]
      %v398 = vld [vmem:[#allocation3 + $0xc] sm:$0xf]
      %v399 = vld [vmem:[#allocation3 + $0x10] sm:$0xf]
      %v400 = vld [vmem:[#allocation3 + $0x14] sm:$0xf]
      %v401 = vld [vmem:[#allocation3 + $0x18] sm:$0xf]
      %v402 = vld [vmem:[#allocation3 + $0x1c] sm:$0xf]
      %v403 = vld [vmem:[#allocation3 + $0x20] sm:$0xf]
      %v404 = vld [vmem:[#allocation3 + $0x24] sm:$0xf]
      %v405 = vld [vmem:[#allocation3 + $0x28] sm:$0xf]
      %v406 = vld [vmem:[#allocation3 + $0x2c] sm:$0xf]
      %v407 = vld [vmem:[#allocation3 + $0x30] sm:$0xf]
      %v408 = vld [vmem:[#allocation3 + $0x34] sm:$0xf]
      %v409 = vld [vmem:[#allocation3 + $0x38] sm:$0xf]
      %v410 = vld [vmem:[#allocation3 + $0x3c] sm:$0xf]
      %v411 = vld [vmem:[#allocation3 + $0x40] sm:$0xf]
      %v412 = vld [vmem:[#allocation3 + $0x44] sm:$0xf]
      %v413 = vld [vmem:[%s2] sm:$0xff]
      %v414 = vld [vmem:[%s2 + $0x8] sm:$0xff]
      %v415 = vld [vmem:[%s2 + $0x10] sm:$0xff]
      %v416 = vld [vmem:[%s2 + $0x18] sm:$0xff]
      %418 = vset.pattern.permute.xlu0 0
      %419 = vperm.xlu0 %418, %v413
      %v420 = vpop.permute.xlu0 %419
      %423 = vset.pattern.permute.xlu0 0
      %424 = vperm.xlu0 %423, %v414
      %v425 = vpop.permute.xlu0 %424
      %428 = vset.pattern.permute.xlu0 0
      %429 = vperm.xlu0 %428, %v415
      %v430 = vpop.permute.xlu0 %429
      %433 = vset.pattern.permute.xlu0 0
      %434 = vperm.xlu0 %433, %v416
      %v435 = vpop.permute.xlu0 %434
      %v441 = vunpack.c.l.b16 %v391
      %v442 = vunpack.c.h.b16 %v391
      %v443 = vunpack.c.l.b16 %v392
      %v444 = vunpack.c.h.b16 %v392
      %v445 = vunpack.c.l.b16 %v393
      %v446 = vunpack.c.h.b16 %v393
      %v447 = vunpack.c.l.b16 %v394
      %v448 = vunpack.c.h.b16 %v394
      %v449 = vpack.c.b16 %v443, %v441
      %v450 = vpack.c.b16 %v444, %v442
      %v451 = vpack.c.b16 %v447, %v445
      %v452 = vpack.c.b16 %v448, %v446
      %v473 = vunpack.c.l.b16 %v395
      %v474 = vunpack.c.l.b16 %v396
      %v475 = vunpack.c.l.b16 %v397
      %v476 = vunpack.c.l.b16 %v398
      %v477 = vunpack.c.l.b16 %v399
      %v478 = vunpack.c.l.b16 %v400
      %v479 = vunpack.c.l.b16 %v401
      %v480 = vunpack.c.l.b16 %v402
      %v481 = vunpack.c.l.b16 %v403
      %v482 = vunpack.c.l.b16 %v404
      %v483 = vunpack.c.l.b16 %v405
      %v484 = vunpack.c.l.b16 %v406
      %v485 = vunpack.c.l.b16 %v407
      %v486 = vunpack.c.l.b16 %v408
      %v487 = vunpack.c.l.b16 %v409
      %v488 = vunpack.c.l.b16 %v410
      %v489 = vunpack.c.l.b16 %v411
      %v490 = vunpack.c.l.b16 %v412
      %v491 = vpack.c.b16 %v474, %v473
      %v492 = vpack.c.b16 %v476, %v475
      %v493 = vpack.c.b16 %v478, %v477
      %v494 = vpack.c.b16 %v480, %v479
      %v495 = vpack.c.b16 %v482, %v481
      %v496 = vpack.c.b16 %v484, %v483
      %v497 = vpack.c.b16 %v486, %v485
      %v498 = vpack.c.b16 %v488, %v487
      %v499 = vpack.c.b16 %v490, %v489
      %vm509 = vcmask 130048
      %v511 = vsel %vm509, %v450, 0
      %v514 = vsel %vm509, %v452, 0
      %516 = vmatprep.subr.bf16.mxu0 0
      %517 = vmatpush1.bf16.msra.mxu0 %v498
      %518 = vmatprep.subr.bf16.mxu0 0
      %519 = vmatpush1.bf16.msra.mxu0 %v497
      %520 = vmatprep.subr.bf16.mxu0 0
      %521 = vmatpush1.bf16.msra.mxu0 %v496
      %522 = vmatprep.subr.bf16.mxu0 0
      %523 = vmatpush1.bf16.msra.mxu0 %v495
      %524 = vmatprep.subr.bf16.mxu0 0
      %525 = vmatpush1.bf16.msra.mxu0 %v494
      %526 = vmatprep.subr.bf16.mxu0 0
      %527 = vmatpush1.bf16.msra.mxu0 %v493
      %528 = vmatprep.subr.bf16.mxu0 0
      %529 = vmatpush1.bf16.msra.mxu0 %v492
      %530 = vmatprep.subr.bf16.mxu0 0
      %531 = vmatpush1.bf16.msra.mxu0 %v491
      %532 = vmatprep.subr.bf16.mxu0 0
      %533 = vmatpush2.bf16.msra.mxu0 0
      %534 = vmatprep.subr.bf16.mxu0 0
      %535 = vmatpush2.bf16.msra.mxu0 0
      %536 = vmatprep.subr.bf16.mxu0 0
      %537 = vmatpush2.bf16.msra.mxu0 0
      %538 = vmatprep.subr.bf16.mxu0 0
      %539 = vmatpush2.bf16.msra.mxu0 0
      %540 = vmatprep.subr.bf16.mxu0 0
      %541 = vmatpush2.bf16.msra.mxu0 0
      %542 = vmatprep.subr.bf16.mxu0 0
      %543 = vmatpush2.bf16.msra.mxu0 0
      %544 = vmatprep.subr.bf16.mxu0 0
      %545 = vmatpush2.bf16.msra.mxu0 0
      %546 = vmatprep.subr.bf16.mxu0 0
      %547 = vmatpush2.bf16.msra.mxu0 %v499
      %548 = vmatprep.mubr.bf16.mxu0 %v511
      %549 = vmatmul.mubr.bf16.gmra.mxu0 %v449
      %v550 = vpop.f32.mrf.mxu0
      %v551 = vadd.f32 %v420, %v550
      %v552 = vpop.f32.mrf.mxu0
      %v553 = vpop.f32.mrf.mxu0
      %v554 = vadd.f32 %v425, %v553
      %v555 = vpop.f32.mrf.mxu0
      %556 = vmatprep.mubr.bf16.mxu0 %v514
      %557 = vmatmul.mubr.bf16.gmra.mxu0 %v451
      %v558 = vpop.f32.mrf.mxu0
      %v559 = vadd.f32 %v430, %v558
      %v560 = vpop.f32.mrf.mxu0
      %v561 = vpop.f32.mrf.mxu0
      %v562 = vadd.f32 %v435, %v561
      %v563 = vpop.f32.mrf.mxu0
      %564 = vdwg.mxu0
      %v565 = vxor.u32 %v551, 2147483648
      %v566 = vxor.u32 %v554, 2147483648
      %v567 = vxor.u32 %v559, 2147483648
      %v568 = vxor.u32 %v562, 2147483648
      %v569 = vmul.f32 %v565, 1.442695
      %v570 = vpow.pop %v569
      %v571 = vmul.f32 %v566, 1.442695
      %v572 = vpow.pop %v571
      %v573 = vmul.f32 %v567, 1.442695
      %v574 = vpow.pop %v573
      %v575 = vmul.f32 %v568, 1.442695
      %v576 = vpow.pop %v575
      %v577 = vadd.f32 %v570, 1.0
      %v578 = vadd.f32 %v572, 1.0
      %v579 = vadd.f32 %v574, 1.0
      %v580 = vadd.f32 %v576, 1.0
      %v581 = vrcp.pop %v577
      %v582 = vmul.f32 1.0, %v581
      %v583 = vrcp.pop %v578
      %v584 = vmul.f32 1.0, %v583
      %v585 = vrcp.pop %v579
      %v586 = vmul.f32 1.0, %v585
      %v587 = vrcp.pop %v580
      %v588 = vmul.f32 1.0, %v587
      %v589 = vmul.f32 %v551, %v582
      %v590 = vmul.f32 %v554, %v584
      %v591 = vmul.f32 %v559, %v586
      %v592 = vmul.f32 %v562, %v588
      %v593 = vpack.c.bf16 %v590, %v589
      %v594 = vpack.c.bf16 %v592, %v591
      %v597 = vunpack.c.l.b16 %v593
      %v598 = vunpack.c.h.b16 %v593
      %v599 = vunpack.c.l.b16 %v594
      %v600 = vunpack.c.h.b16 %v594
      %v601 = vpack.c.b16 %v597, %v597
      %v602 = vpack.c.b16 %v598, %v598
      %v603 = vpack.c.b16 %v599, %v599
      %v604 = vpack.c.b16 %v600, %v600
      %609 = vst.msk [vmem:[%s217] sm:$0xf] %vm265, %v601
      %610 = vst.msk [vmem:[%s217 + $0x4] sm:$0xf] %vm265, %v602
      %611 = vst.msk [vmem:[%s217 + $0x8] sm:$0xf] %vm265, %v603
      %612 = vst.msk [vmem:[%s217 + $0xc] sm:$0xf] %vm265, %v604
      %p613 = scmp.lt.s32.totalorder %s19, 1
      %s614 = scalar_select %p613, %s19, 1
      %p615 = scmp.lt.s32.totalorder %s20, 0
      %s616 = scalar_select %p615, %s20, 0
      %s617 = smul.addr %s614, 4
      %s618 = sadd.s32 %s616, %s617
      %s619 = smul.addr %s618, 4
      %s620 = scalar_lea.vmem %s4, %s619
      // Predicated region
      $region37: #{focus_forward.1} parent=35 // pred_check
        %p621 = pneg %p136
      $region38: #{focus_forward.1} parent=35 // pred_check_branch
        %623 = sbr.rel (%p621) target = $region40
      $region39: #{focus_forward.1} parent=35 // pred_region
        _
      $region40: #{focus_forward.1} parent=35 // pred_fallthru
        _
    $region36: #{focus_forward.1} parent=5 // pred_fallthru
      _
    %p624 = scmp.le.s32.totalorder 2, %s10
    // Predicated region
    $region41: #{focus_forward.1} parent=5 // pred_check
      %p625 = pneg %p624
    $region42: #{focus_forward.1} parent=5 // pred_check_branch
      %627 = sbr.rel (%p625) target = $region44
    $region43: #{focus_forward.1} parent=5 // pred_region
      %s628 = ssub.s32 %s10, 2
      // Predicated region
      $region45: #{focus_forward.1} parent=43 // pred_check
        %p629 = pneg %p142
      $region46: #{focus_forward.1} parent=43 // pred_check_branch
        %631 = sbr.rel (%p629) target = $region48
      $region47: #{focus_forward.1} parent=43 // pred_region
        %p632 = scmp.lt.s32.totalorder %s21, 1
        %s633 = scalar_select %p632, %s21, 1
        %p634 = scmp.lt.s32.totalorder %s22, 0
        %s635 = scalar_select %p634, %s22, 0
        %s636 = smul.addr %s633, 4
        %s637 = sadd.s32 %s635, %s636
        %s638 = smul.addr %s637, 4
        %s639 = scalar_lea.vmem %s4, %s638
      $region48: #{focus_forward.1} parent=43 // pred_fallthru
        _
    $region44: #{focus_forward.1} parent=5 // pred_fallthru
      _
  $region6: #{focus_forward.1} parent=0 // loop_footer
    %s14 = sadd.s32 1, %s10
  $region7: #{focus_forward.1} parent=0 // loop_footer_branch
    %9 = sbr.rel target = $region3
  $region8: #{focus_forward.1} parent=0 // loop_exit
    _

</llo_original>
